<compile_context>
chip_gen: v7x
topology: tpu7x:2x2x1
jax: 0.10.0
libtpu: 0.0.40
codegen_flags: <defaults>
</compile_context>

<pallas_src>
import math

import jax
import jax.numpy as jnp
from jax import lax
from jax.experimental import pallas as pl
from jax.experimental.pallas import tpu as pltpu


_THREEFRY_ROUNDS = 12                       # ample quality for augmentation noise
_ROTATIONS = (13, 15, 26, 6, 17, 29, 16, 24)
_PARITY = 0x1BD11BDA


def _rotl32(x, r):
    """Rotate-left on uint32 values (r is a static Python int, 0 < r < 32)."""
    return (x << r) | (x >> (32 - r))


def _threefry2x32(k0, k1, c0, c1):
    """Vectorized Threefry-2x32: (key scalars, counter arrays) -> 2 x uint32 bits."""
    ks = (k0, k1, k0 ^ k1 ^ jnp.uint32(_PARITY))
    x0 = c0 + k0
    x1 = c1 + k1
    for g in range(_THREEFRY_ROUNDS // 4):
        for j in range(4):
            r = _ROTATIONS[(g % 2) * 4 + j]
            x0 = x0 + x1
            x1 = _rotl32(x1, r)
            x1 = x1 ^ x0
        x0 = x0 + ks[(g + 1) % 3]
        x1 = x1 + ks[(g + 2) % 3] + jnp.uint32(g + 1)
    return x0, x1


def _bits_to_unit(bits):
    """uint32 bits -> float32 uniform in [1.0, 2.0) via the exponent-bit trick."""
    return lax.bitcast_convert_type((bits >> 9) | jnp.uint32(0x3F800000),
                                    jnp.float32)


def _random_noise_kernel(key_ref, scale_ref, img_ref, out_ref):
    # key_ref:   SMEM int32[2]    per-call Threefry key
    # scale_ref: SMEM float32[1]  per-call uniform noise level
    # img_ref / out_ref: VMEM float32[TILE_H, W] row tile
    tile_h, w = img_ref.shape
    half = tile_h // 2

    # Hoist scalars once per tile.
    s = scale_ref[0]
    k0 = key_ref[0].astype(jnp.uint32)
    k1 = key_ref[1].astype(jnp.uint32)

    # Per-pair counters: (global half-row index, column) -> unique across the
    # whole image and across grid steps, i.e. an independent stream per tile.
    i = pl.program_id(0)
    row = lax.broadcasted_iota(jnp.int32, (half, w), 0) + i * half
    col = lax.broadcasted_iota(jnp.int32, (half, w), 1)
    b0, b1 = _threefry2x32(k0, k1, row.astype(jnp.uint32), col.astype(jnp.uint32))

    # Uniforms: u1 in (0, 1] (log always finite), theta in [0, 2*pi).
    u1 = jnp.float32(2.0) - _bits_to_unit(b0)
    theta = (_bits_to_unit(b1) - jnp.float32(1.0)) * jnp.float32(2.0 * math.pi)

    # Full Box-Muller pair: one 64-bit hash -> two independent N(0, 1) samples,
    # written to the two sublane-aligned row-halves of the tile.
    r = jnp.sqrt(jnp.float32(-2.0) * jnp.log(u1))
    out_ref[:half, :] = img_ref[:half, :] + (r * jnp.cos(theta)) * s
    out_ref[half:, :] = img_ref[half:, :] + (r * jnp.sin(theta)) * s


def _round_up(x, m):
    return (x + m - 1) // m * m


def random_noise(image, seed: int, noise_range=(0.0, 0.5)):
    """Apply RandomNoise to a gray image of shape (1, H, W) (float)."""
    if not isinstance(noise_range, (tuple, list)):
        noise_range = (0.0, float(noise_range))
    lo, hi = float(noise_range[0]), float(noise_range[1])

    orig_shape = image.shape
    h, w = orig_shape[-2], orig_shape[-1]
    img2d = image.reshape(h, w).astype(jnp.float32)

    # Lane-dense / sublane-aligned padding: W -> x128 (unmasked stores),
    # H -> x16 (tiles split into two 8-row-aligned halves). No-op if aligned.
    wp = _round_up(w, 128)
    hp = _round_up(h, 16)
    if (hp, wp) != (h, w):
        img2d = jnp.pad(img2d, ((0, hp - h), (0, wp - w)))

    # Row tile ~2 MiB per block (multiple of 16 rows): with the default 2-deep
    # pipelining of input+output this stays well under the scoped-VMEM limit on
    # v5e (16 MiB) and v6e/v7x (32 MiB).
    target_rows = max(16, (2 * 1024 * 1024) // (4 * wp) // 16 * 16)
    tile_h = min(hp, target_rows)
    grid = (pl.cdiv(hp, tile_h),)

    # Per-call randomness (glue, mirrors torch.rand and the randn seed).
    key = jax.random.PRNGKey(seed)
    k_scale, k_key = jax.random.split(key)
    scale = jax.random.uniform(k_scale, (1,), jnp.float32) * (hi - lo) + lo
    key_words = jax.random.randint(k_key, (2,), 0, jnp.iinfo(jnp.int32).max,
                                   dtype=jnp.int32)

    kwargs = {}
    if jax.default_backend() == "tpu":
        # Megacore: row tiles are independent -> shard across TensorCores (v7x).
        kwargs["compiler_params"] = pltpu.CompilerParams(
            dimension_semantics=("parallel",))

    out2d = pl.pallas_call(
        _random_noise_kernel,
        out_shape=jax.ShapeDtypeStruct((hp, wp), jnp.float32),
        grid=grid,
        in_specs=[
            pl.BlockSpec(memory_space=pltpu.MemorySpace.SMEM),      # key
            pl.BlockSpec(memory_space=pltpu.MemorySpace.SMEM),      # scale
            pl.BlockSpec((tile_h, wp), lambda i: (i, 0)),           # image tile
        ],
        out_specs=pl.BlockSpec((tile_h, wp), lambda i: (i, 0)),
        **kwargs,
    )(key_words, scale, img2d)

    return out2d[:h, :w].reshape(orig_shape).astype(image.dtype)


if __name__ == "__main__":
    key = jax.random.PRNGKey(0)
    # Gray image in the PyTorch layout (C=1, H, W); W lane-dense (128).
    image = jax.random.uniform(key, (1, 16, 128), dtype=jnp.float32)

    out = random_noise(image, seed=0, noise_range=(0.0, 0.5))
    out = jax.block_until_ready(out)

    assert out.shape == image.shape and out.dtype == image.dtype
    assert bool(jnp.all(jnp.isfinite(out)))
    # Additive noise sanity: std bounded by max scale (0.5) with wide margin.
    diff = out - image
    assert float(jnp.std(diff)) < 3.0

    print("KERNEL_OK")
</pallas_src>

<mosaic_0001>
module attributes {stable_mosaic.version = 11 : i64} {
  func.func @_random_noise_kernel(%arg0: i32, %arg1: memref<2xi32, #tpu.memory_space<smem>>, %arg2: memref<1xf32, #tpu.memory_space<smem>>, %arg3: memref<16x128xf32, #tpu.memory_space<vmem>>, %arg4: memref<16x128xf32, #tpu.memory_space<vmem>>) attributes {dimension_semantics = [#tpu.dimension_semantics<arbitrary>], iteration_bounds = array<i64: 1>, scalar_prefetch = 0 : i64, scratch_operands = 0 : i64, tpu.core_type = #tpu.core_type<tc>, window_params = [{transform_indices = @transform_0, window_bounds = array<i64: 2>}, {transform_indices = @transform_1, window_bounds = array<i64: 1>}, {transform_indices = @transform_2, window_bounds = array<i64: 16, 128>}, {transform_indices = @transform_3, window_bounds = array<i64: 16, 128>}]} {
    %c0 = arith.constant 0 : index
    %0 = memref.load %arg2[%c0] : memref<1xf32, #tpu.memory_space<smem>>
    %c0_0 = arith.constant 0 : index
    %1 = memref.load %arg1[%c0_0] : memref<2xi32, #tpu.memory_space<smem>>
    %c1 = arith.constant 1 : index
    %2 = memref.load %arg1[%c1] : memref<2xi32, #tpu.memory_space<smem>>
    %3 = tpu.iota {dimensions = array<i32: 0>} : vector<8x128xi32>
    %c8_i32 = arith.constant 8 : i32
    %4 = arith.muli %arg0, %c8_i32 : i32
    %5 = vector.broadcast %4 : i32 to vector<8x128xi32>
    %6 = arith.addi %3, %5 : vector<8x128xi32>
    %7 = tpu.iota {dimensions = array<i32: 1>} : vector<8x128xi32>
    %8 = arith.xori %1, %2 : i32
    %c466688986_i32 = arith.constant 466688986 : i32
    %9 = arith.xori %8, %c466688986_i32 : i32
    %10 = vector.broadcast %1 : i32 to vector<8x128xi32>
    %11 = arith.addi %6, %10 : vector<8x128xi32>
    %12 = vector.broadcast %2 : i32 to vector<8x128xi32>
    %13 = arith.addi %7, %12 : vector<8x128xi32>
    %14 = arith.addi %11, %13 : vector<8x128xi32>
    %c13_i32 = arith.constant 13 : i32
    %15 = vector.broadcast %c13_i32 : i32 to vector<8x128xi32>
    %16 = arith.shli %13, %15 : vector<8x128xi32>
    %c19_i32 = arith.constant 19 : i32
    %17 = vector.broadcast %c19_i32 : i32 to vector<8x128xi32>
    %18 = arith.shrui %13, %17 : vector<8x128xi32>
    %19 = arith.ori %16, %18 : vector<8x128xi32>
    %20 = arith.xori %19, %14 : vector<8x128xi32>
    %21 = arith.addi %14, %20 : vector<8x128xi32>
    %c15_i32 = arith.constant 15 : i32
    %22 = vector.broadcast %c15_i32 : i32 to vector<8x128xi32>
    %23 = arith.shli %20, %22 : vector<8x128xi32>
    %c17_i32 = arith.constant 17 : i32
    %24 = vector.broadcast %c17_i32 : i32 to vector<8x128xi32>
    %25 = arith.shrui %20, %24 : vector<8x128xi32>
    %26 = arith.ori %23, %25 : vector<8x128xi32>
    %27 = arith.xori %26, %21 : vector<8x128xi32>
    %28 = arith.addi %21, %27 : vector<8x128xi32>
    %c26_i32 = arith.constant 26 : i32
    %29 = vector.broadcast %c26_i32 : i32 to vector<8x128xi32>
    %30 = arith.shli %27, %29 : vector<8x128xi32>
    %c6_i32 = arith.constant 6 : i32
    %31 = vector.broadcast %c6_i32 : i32 to vector<8x128xi32>
    %32 = arith.shrui %27, %31 : vector<8x128xi32>
    %33 = arith.ori %30, %32 : vector<8x128xi32>
    %34 = arith.xori %33, %28 : vector<8x128xi32>
    %35 = arith.addi %28, %34 : vector<8x128xi32>
    %c6_i32_1 = arith.constant 6 : i32
    %36 = vector.broadcast %c6_i32_1 : i32 to vector<8x128xi32>
    %37 = arith.shli %34, %36 : vector<8x128xi32>
    %c26_i32_2 = arith.constant 26 : i32
    %38 = vector.broadcast %c26_i32_2 : i32 to vector<8x128xi32>
    %39 = arith.shrui %34, %38 : vector<8x128xi32>
    %40 = arith.ori %37, %39 : vector<8x128xi32>
    %41 = arith.xori %40, %35 : vector<8x128xi32>
    %42 = vector.broadcast %2 : i32 to vector<8x128xi32>
    %43 = arith.addi %35, %42 : vector<8x128xi32>
    %44 = vector.broadcast %9 : i32 to vector<8x128xi32>
    %45 = arith.addi %41, %44 : vector<8x128xi32>
    %c1_i32 = arith.constant 1 : i32
    %46 = vector.broadcast %c1_i32 : i32 to vector<8x128xi32>
    %47 = arith.addi %45, %46 : vector<8x128xi32>
    %48 = arith.addi %43, %47 : vector<8x128xi32>
    %c17_i32_3 = arith.constant 17 : i32
    %49 = vector.broadcast %c17_i32_3 : i32 to vector<8x128xi32>
    %50 = arith.shli %47, %49 : vector<8x128xi32>
    %c15_i32_4 = arith.constant 15 : i32
    %51 = vector.broadcast %c15_i32_4 : i32 to vector<8x128xi32>
    %52 = arith.shrui %47, %51 : vector<8x128xi32>
    %53 = arith.ori %50, %52 : vector<8x128xi32>
    %54 = arith.xori %53, %48 : vector<8x128xi32>
    %55 = arith.addi %48, %54 : vector<8x128xi32>
    %c29_i32 = arith.constant 29 : i32
    %56 = vector.broadcast %c29_i32 : i32 to vector<8x128xi32>
    %57 = arith.shli %54, %56 : vector<8x128xi32>
    %c3_i32 = arith.constant 3 : i32
    %58 = vector.broadcast %c3_i32 : i32 to vector<8x128xi32>
    %59 = arith.shrui %54, %58 : vector<8x128xi32>
    %60 = arith.ori %57, %59 : vector<8x128xi32>
    %61 = arith.xori %60, %55 : vector<8x128xi32>
    %62 = arith.addi %55, %61 : vector<8x128xi32>
    %c16_i32 = arith.constant 16 : i32
    %63 = vector.broadcast %c16_i32 : i32 to vector<8x128xi32>
    %64 = arith.shli %61, %63 : vector<8x128xi32>
    %c16_i32_5 = arith.constant 16 : i32
    %65 = vector.broadcast %c16_i32_5 : i32 to vector<8x128xi32>
    %66 = arith.shrui %61, %65 : vector<8x128xi32>
    %67 = arith.ori %64, %66 : vector<8x128xi32>
    %68 = arith.xori %67, %62 : vector<8x128xi32>
    %69 = arith.addi %62, %68 : vector<8x128xi32>
    %c24_i32 = arith.constant 24 : i32
    %70 = vector.broadcast %c24_i32 : i32 to vector<8x128xi32>
    %71 = arith.shli %68, %70 : vector<8x128xi32>
    %c8_i32_6 = arith.constant 8 : i32
    %72 = vector.broadcast %c8_i32_6 : i32 to vector<8x128xi32>
    %73 = arith.shrui %68, %72 : vector<8x128xi32>
    %74 = arith.ori %71, %73 : vector<8x128xi32>
    %75 = arith.xori %74, %69 : vector<8x128xi32>
    %76 = vector.broadcast %9 : i32 to vector<8x128xi32>
    %77 = arith.addi %69, %76 : vector<8x128xi32>
    %78 = vector.broadcast %1 : i32 to vector<8x128xi32>
    %79 = arith.addi %75, %78 : vector<8x128xi32>
    %c2_i32 = arith.constant 2 : i32
    %80 = vector.broadcast %c2_i32 : i32 to vector<8x128xi32>
    %81 = arith.addi %79, %80 : vector<8x128xi32>
    %82 = arith.addi %77, %81 : vector<8x128xi32>
    %c13_i32_7 = arith.constant 13 : i32
    %83 = vector.broadcast %c13_i32_7 : i32 to vector<8x128xi32>
    %84 = arith.shli %81, %83 : vector<8x128xi32>
    %c19_i32_8 = arith.constant 19 : i32
    %85 = vector.broadcast %c19_i32_8 : i32 to vector<8x128xi32>
    %86 = arith.shrui %81, %85 : vector<8x128xi32>
    %87 = arith.ori %84, %86 : vector<8x128xi32>
    %88 = arith.xori %87, %82 : vector<8x128xi32>
    %89 = arith.addi %82, %88 : vector<8x128xi32>
    %c15_i32_9 = arith.constant 15 : i32
    %90 = vector.broadcast %c15_i32_9 : i32 to vector<8x128xi32>
    %91 = arith.shli %88, %90 : vector<8x128xi32>
    %c17_i32_10 = arith.constant 17 : i32
    %92 = vector.broadcast %c17_i32_10 : i32 to vector<8x128xi32>
    %93 = arith.shrui %88, %92 : vector<8x128xi32>
    %94 = arith.ori %91, %93 : vector<8x128xi32>
    %95 = arith.xori %94, %89 : vector<8x128xi32>
    %96 = arith.addi %89, %95 : vector<8x128xi32>
    %c26_i32_11 = arith.constant 26 : i32
    %97 = vector.broadcast %c26_i32_11 : i32 to vector<8x128xi32>
    %98 = arith.shli %95, %97 : vector<8x128xi32>
    %c6_i32_12 = arith.constant 6 : i32
    %99 = vector.broadcast %c6_i32_12 : i32 to vector<8x128xi32>
    %100 = arith.shrui %95, %99 : vector<8x128xi32>
    %101 = arith.ori %98, %100 : vector<8x128xi32>
    %102 = arith.xori %101, %96 : vector<8x128xi32>
    %103 = arith.addi %96, %102 : vector<8x128xi32>
    %c6_i32_13 = arith.constant 6 : i32
    %104 = vector.broadcast %c6_i32_13 : i32 to vector<8x128xi32>
    %105 = arith.shli %102, %104 : vector<8x128xi32>
    %c26_i32_14 = arith.constant 26 : i32
    %106 = vector.broadcast %c26_i32_14 : i32 to vector<8x128xi32>
    %107 = arith.shrui %102, %106 : vector<8x128xi32>
    %108 = arith.ori %105, %107 : vector<8x128xi32>
    %109 = arith.xori %108, %103 : vector<8x128xi32>
    %110 = vector.broadcast %1 : i32 to vector<8x128xi32>
    %111 = arith.addi %103, %110 : vector<8x128xi32>
    %112 = vector.broadcast %2 : i32 to vector<8x128xi32>
    %113 = arith.addi %109, %112 : vector<8x128xi32>
    %c3_i32_15 = arith.constant 3 : i32
    %114 = vector.broadcast %c3_i32_15 : i32 to vector<8x128xi32>
    %115 = arith.addi %113, %114 : vector<8x128xi32>
    %c9_i32 = arith.constant 9 : i32
    %116 = vector.broadcast %c9_i32 : i32 to vector<8x128xi32>
    %117 = arith.shrui %111, %116 : vector<8x128xi32>
    %c1065353216_i32 = arith.constant 1065353216 : i32
    %118 = vector.broadcast %c1065353216_i32 : i32 to vector<8x128xi32>
    %119 = arith.ori %117, %118 : vector<8x128xi32>
    %120 = tpu.bitcast %119 : vector<8x128xi32> -> vector<8x128xf32>
    %cst = arith.constant 2.000000e+00 : f32
    %121 = vector.broadcast %cst : f32 to vector<8x128xf32>
    %122 = arith.subf %121, %120 : vector<8x128xf32>
    %c9_i32_16 = arith.constant 9 : i32
    %123 = vector.broadcast %c9_i32_16 : i32 to vector<8x128xi32>
    %124 = arith.shrui %115, %123 : vector<8x128xi32>
    %c1065353216_i32_17 = arith.constant 1065353216 : i32
    %125 = vector.broadcast %c1065353216_i32_17 : i32 to vector<8x128xi32>
    %126 = arith.ori %124, %125 : vector<8x128xi32>
    %127 = tpu.bitcast %126 : vector<8x128xi32> -> vector<8x128xf32>
    %cst_18 = arith.constant 1.000000e+00 : f32
    %128 = vector.broadcast %cst_18 : f32 to vector<8x128xf32>
    %129 = arith.subf %127, %128 : vector<8x128xf32>
    %cst_19 = arith.constant 6.28318548 : f32
    %130 = vector.broadcast %cst_19 : f32 to vector<8x128xf32>
    %131 = arith.mulf %129, %130 : vector<8x128xf32>
    %132 = math.log %122 : vector<8x128xf32>
    %cst_20 = arith.constant -2.000000e+00 : f32
    %133 = vector.broadcast %cst_20 : f32 to vector<8x128xf32>
    %134 = arith.mulf %133, %132 : vector<8x128xf32>
    %135 = math.sqrt %134 : vector<8x128xf32>
    %c0_21 = arith.constant 0 : index
    %c0_22 = arith.constant 0 : index
    %136 = vector.load %arg3[%c0_21, %c0_22] : memref<16x128xf32, #tpu.memory_space<vmem>>, vector<8x128xf32>
    %137 = math.cos %131 : vector<8x128xf32>
    %138 = arith.mulf %135, %137 : vector<8x128xf32>
    %139 = vector.broadcast %0 : f32 to vector<8x128xf32>
    %140 = arith.mulf %138, %139 : vector<8x128xf32>
    %141 = arith.addf %136, %140 : vector<8x128xf32>
    %c0_23 = arith.constant 0 : index
    %c0_24 = arith.constant 0 : index
    %142 = vector.load %arg4[%c0_23, %c0_24] : memref<16x128xf32, #tpu.memory_space<vmem>>, vector<8x128xf32>
    tpu.vector_store %arg4[%c0_23, %c0_24], %141 {strides = array<i32>} : memref<16x128xf32, #tpu.memory_space<vmem>>, vector<8x128xf32>,
    %c8 = arith.constant 8 : index
    %c0_25 = arith.constant 0 : index
    %143 = vector.load %arg3[%c8, %c0_25] : memref<16x128xf32, #tpu.memory_space<vmem>>, vector<8x128xf32>
    %144 = math.sin %131 : vector<8x128xf32>
    %145 = arith.mulf %135, %144 : vector<8x128xf32>
    %146 = vector.broadcast %0 : f32 to vector<8x128xf32>
    %147 = arith.mulf %145, %146 : vector<8x128xf32>
    %148 = arith.addf %143, %147 : vector<8x128xf32>
    %c8_26 = arith.constant 8 : index
    %c0_27 = arith.constant 0 : index
    %149 = vector.load %arg4[%c8_26, %c0_27] : memref<16x128xf32, #tpu.memory_space<vmem>>, vector<8x128xf32>
    tpu.vector_store %arg4[%c8_26, %c0_27], %148 {strides = array<i32>} : memref<16x128xf32, #tpu.memory_space<vmem>>, vector<8x128xf32>,
    return
  }
  func.func @transform_0(%arg0: i32) -> i32 {
    %c0_i32 = arith.constant 0 : i32
    %c0_i32_0 = arith.constant 0 : i32
    return %c0_i32 : i32
  }
  func.func @transform_1(%arg0: i32) -> i32 {
    %c0_i32 = arith.constant 0 : i32
    %c0_i32_0 = arith.constant 0 : i32
    return %c0_i32 : i32
  }
  func.func @transform_2(%arg0: i32) -> (i32, i32) {
    %c0_i32 = arith.constant 0 : i32
    %c0_i32_0 = arith.constant 0 : i32
    return %arg0, %c0_i32 : i32, i32
  }
  func.func @transform_3(%arg0: i32) -> (i32, i32) {
    %c0_i32 = arith.constant 0 : i32
    %c0_i32_0 = arith.constant 0 : i32
    return %arg0, %c0_i32 : i32, i32
  }
}

</mosaic_0001>

<llo_original>
// kernel: tpu_custom_call.1
$region0: #{tpu_custom_call.1}
  #allocation0 [shape = 'u32[]', space=smem, size = 0x4, offset = 0x4, fixed_abs, tag = 'smem constant byte address 0x4 - core index']
  #allocation1 [shape = 'u32[144,128]{1,0:T(1,128)}', space=vmem, size = 0x12000, scoped, tag = 'internal scratch']
  #allocation2 [shape = 'f32[1]{0:T(128)S(6)}', space=smem, size = 0x200, scoped, tag = 'scoped memory for tpu_custom_call.1']
  %s0 = inlined_call_operand.vmem [shape: s32[2], index: 0, kind: input, shape index: {}]
  %s1 = inlined_call_operand.<no memory space> [shape: f32[1], index: 1, kind: input, shape index: {}]
  %s2 = inlined_call_operand.hbm [shape: f32[16,128], index: 2, kind: input, shape index: {}]
  %s3 = inlined_call_operand.hbm [shape: f32[16,128], index: 3, kind: output, shape index: {}]
  %s4 = sld [smem:[#allocation0]]
  $region30: #{tpu_custom_call.1} parent=0
    _
  %s6 = ssub.s32 1, %s4
  %s7 = scalar_select 0, %s6, %s4
  %8 = sst [smem:[#allocation2]] %s1
  $region1: #{tpu_custom_call.1} parent=0
    #allocation3 [shape = 'u8[512]{0}', space=smem, size = 0x200, scoped, tag = 'input window, operand 0, single buffered']
    #allocation4 [shape = 's32[1]{0}', space=sflag, size = 0x4, scoped, tag = 'scoped memory for tpu_custom_call.1']
    #allocation5 [shape = 's32[1]{0}', space=sflag, size = 0x4, scoped, tag = 'scoped memory for tpu_custom_call.1']
    #allocation6 [shape = 's32[1]{0}', space=sflag, size = 0x4, scoped, tag = 'scoped memory for tpu_custom_call.1']
    #allocation7 [shape = 'u8[8192]{0}', space=vmem, size = 0x2000, scoped, tag = 'input window, operand 2, single buffered']
    #allocation8 [shape = 'u8[8192]{0}', space=vmem, size = 0x2000, scoped, tag = 'output window, operand 0, single buffered']
    %9 = vsyncpa [#allocation6], 0
    %10 = vsyncpa [#allocation4], 0
    %11 = vsyncpa [#allocation5], 0
    // Predicated region
    $region2: #{tpu_custom_call.1} parent=1 // pred_check
      _
    $region3: #{tpu_custom_call.1} parent=1 // pred_check_branch
      %13 = sbr.rel (0) target = $region5
    $region4: #{tpu_custom_call.1} parent=1 // pred_region
      %s15 = ssub.s32 16, 16
      %16 = vsyncadd [#allocation6], %s15
      %s18 = sshll.u32 %s0, 4
      %s19 = int_to_ptr.vmem [resolvable:$true] %s18
      %21 = dma.vmem_to_smem %s19, 16, [#allocation3], [#allocation6]
    $region5: #{tpu_custom_call.1} parent=1 // pred_fallthru
      _
    // Predicated region
    $region6: #{tpu_custom_call.1} parent=1 // pred_check
      _
    $region7: #{tpu_custom_call.1} parent=1 // pred_check_branch
      %23 = sbr.rel (0) target = $region9
    $region8: #{tpu_custom_call.1} parent=1 // pred_region
      _
    $region9: #{tpu_custom_call.1} parent=1 // pred_fallthru
      _
    // Predicated region
    $region10: #{tpu_custom_call.1} parent=1 // pred_check
      _
    $region11: #{tpu_custom_call.1} parent=1 // pred_check_branch
      %25 = sbr.rel (0) target = $region13
    $region12: #{tpu_custom_call.1} parent=1 // pred_region
      %s27 = ssub.s32 256, 256
      %28 = vsyncadd [#allocation4], %s27
      %s29 = sshll.u32 [#allocation7], 4
      %s30 = int_to_ptr.vmem [resolvable:$true] %s29
      %35 = dma.hbm_to_vmem [thread:$0]  %s2, 256, %s30, [#allocation4], 128, 128, 8
    $region13: #{tpu_custom_call.1} parent=1 // pred_fallthru
      _
    // Predicated region
    $region14: #{tpu_custom_call.1} parent=1 // pred_check
      _
    $region15: #{tpu_custom_call.1} parent=1 // pred_check_branch
      %37 = sbr.rel (0) target = $region17
    $region16: #{tpu_custom_call.1} parent=1 // pred_region
      %38 = dma.done [#allocation6], 16
    $region17: #{tpu_custom_call.1} parent=1 // pred_fallthru
      _
    // Predicated region
    $region18: #{tpu_custom_call.1} parent=1 // pred_check
      _
    $region19: #{tpu_custom_call.1} parent=1 // pred_check_branch
      %40 = sbr.rel (0) target = $region21
    $region20: #{tpu_custom_call.1} parent=1 // pred_region
      %41 = dma.done [#allocation4], 256
    $region21: #{tpu_custom_call.1} parent=1 // pred_fallthru
      _
    %42 = sfence
    %s43 = sld [smem:[#allocation2]]
    %s44 = sld [smem:[#allocation3]]
    %s45 = sld [smem:[#allocation3 + $0x1]]
    %v46 = vlaneseq
    %v47 = vshrl.u32 %v46, 7
    %s48 = smul.u32 0, 8
    %v49 = vstv %s48
    %v50 = vadd.s32 %v47, %v49
    %v51 = vlaneseq
    %v52 = vand.u32 %v51, 127
    %s53 = sxor.u32 %s44, %s45
    %s54 = sxor.u32 %s53, 466688986
    %v55 = vstv %s44
    %v56 = vadd.s32 %v50, %v55
    %v57 = vstv %s45
    %v58 = vadd.s32 %v52, %v57
    %v59 = vadd.s32 %v56, %v58
    %v60 = vshll.u32 %v58, 13
    %v61 = vshrl.u32 %v58, 19
    %v62 = vor.u32 %v60, %v61
    %v63 = vxor.u32 %v62, %v59
    %v64 = vadd.s32 %v59, %v63
    %v65 = vshll.u32 %v63, 15
    %v66 = vshrl.u32 %v63, 17
    %v67 = vor.u32 %v65, %v66
    %v68 = vxor.u32 %v67, %v64
    %v69 = vadd.s32 %v64, %v68
    %v70 = vshll.u32 %v68, 26
    %v71 = vshrl.u32 %v68, 6
    %v72 = vor.u32 %v70, %v71
    %v73 = vxor.u32 %v72, %v69
    %v74 = vadd.s32 %v69, %v73
    %v75 = vshll.u32 %v73, 6
    %v76 = vshrl.u32 %v73, 26
    %v77 = vor.u32 %v75, %v76
    %v78 = vxor.u32 %v77, %v74
    %v79 = vadd.s32 %v74, %v57
    %v80 = vstv %s54
    %v81 = vadd.s32 %v78, %v80
    %v82 = vadd.s32 %v81, 1
    %v83 = vadd.s32 %v79, %v82
    %v84 = vshll.u32 %v82, 17
    %v85 = vshrl.u32 %v82, 15
    %v86 = vor.u32 %v84, %v85
    %v87 = vxor.u32 %v86, %v83
    %v88 = vadd.s32 %v83, %v87
    %v89 = vshll.u32 %v87, 29
    %v90 = vshrl.u32 %v87, 3
    %v91 = vor.u32 %v89, %v90
    %v92 = vxor.u32 %v91, %v88
    %v93 = vadd.s32 %v88, %v92
    %v94 = vshll.u32 %v92, 16
    %v95 = vshrl.u32 %v92, 16
    %v96 = vor.u32 %v94, %v95
    %v97 = vxor.u32 %v96, %v93
    %v98 = vadd.s32 %v93, %v97
    %v99 = vshll.u32 %v97, 24
    %v100 = vshrl.u32 %v97, 8
    %v101 = vor.u32 %v99, %v100
    %v102 = vxor.u32 %v101, %v98
    %v103 = vadd.s32 %v98, %v80
    %v104 = vadd.s32 %v102, %v55
    %v105 = vadd.s32 %v104, 2
    %v106 = vadd.s32 %v103, %v105
    %v107 = vshll.u32 %v105, 13
    %v108 = vshrl.u32 %v105, 19
    %v109 = vor.u32 %v107, %v108
    %v110 = vxor.u32 %v109, %v106
    %v111 = vadd.s32 %v106, %v110
    %v112 = vshll.u32 %v110, 15
    %v113 = vshrl.u32 %v110, 17
    %v114 = vor.u32 %v112, %v113
    %v115 = vxor.u32 %v114, %v111
    %v116 = vadd.s32 %v111, %v115
    %v117 = vshll.u32 %v115, 26
    %v118 = vshrl.u32 %v115, 6
    %v119 = vor.u32 %v117, %v118
    %v120 = vxor.u32 %v119, %v116
    %v121 = vadd.s32 %v116, %v120
    %v122 = vshll.u32 %v120, 6
    %v123 = vshrl.u32 %v120, 26
    %v124 = vor.u32 %v122, %v123
    %v125 = vxor.u32 %v124, %v121
    %v126 = vadd.s32 %v121, %v55
    %v127 = vadd.s32 %v125, %v57
    %v128 = vadd.s32 %v127, 3
    %v129 = vshrl.u32 %v126, 9
    %v130 = vor.u32 %v129, 1065353216
    %v132 = vsub.f32 2.0, %v130
    %v133 = vshrl.u32 %v128, 9
    %v134 = vor.u32 %v133, 1065353216
    %v136 = vsub.f32 %v134, 1.0
    %v137 = vmul.f32 %v136, 6.2831855
    %v138 = vlog2.pop %v132
    %v139 = vmul.f32 %v138, 0.6931472
    %v140 = vmul.f32 %v139, -2.0
    %v141 = vrsqrt.pop %v140
    %v142 = vmul.f32 %v140, %v141
    %vm143 = vcmp.eq.f32.partialorder %v140, inf
    %v144 = vsel %vm143, %v140, %v142
    %vm145 = vcmp.eq.f32.partialorder %v140, 0.0
    %v146 = vand.u32 %v140, 2147483648
    %v147 = vsel %vm145, %v146, %v144
    %v148 = vld [vmem:[#allocation7] sm:$0xff]
    %v149 = vand.u32 2147483647, %v137
    %vm150 = vcmp.le.f32.partialorder %v149, 0.7853982
    %vm151 = vcmp.lt.s32.totalorder %v137, 0
    %v152 = vand.u32 %v137, 2139095040
    %v153 = vshrl.u32 %v152, 23
    %v154 = vsub.s32 %v153, 127
    %v155 = vand.u32 2147483647, %v137
    %v156 = vand.u32 %v155, 8388607
    %v157 = vor.u32 %v156, 8388608
    %v158 = vsub.s32 0, %v157
    %v159 = vadd.s32 %v154, 1
    %vm160 = vcmp.gt.s32.totalorder %v159, 0
    %v161 = vsel %vm160, %v159, 0
    %v162 = vshrl.u32 %v161, 5
    %v163 = vand.u32 %v161, 31
    %v164 = vsub.s32 32, %v163
    %v165 = vshrl.u32 683565275, %v164
    %v166 = vshll.u32 683565275, %v163
    %v167 = vshrl.u32 2475754826, %v164
    %v168 = vor.u32 %v166, %v167
    %v169 = vshll.u32 2475754826, %v163
    %v170 = vshrl.u32 2131351028, %v164
    %v171 = vor.u32 %v169, %v170
    %v172 = vshll.u32 2131351028, %v163
    %v173 = vshrl.u32 2102212464, %v164
    %v174 = vor.u32 %v172, %v173
    %v175 = vshll.u32 2102212464, %v163
    %v176 = vshrl.u32 920167782, %v164
    %v177 = vor.u32 %v175, %v176
    %v178 = vshll.u32 920167782, %v163
    %v179 = vshrl.u32 1326507024, %v164
    %v180 = vor.u32 %v178, %v179
    %vm181 = vcmp.lt.s32.totalorder %v162, 1
    %vm182 = vcmp.lt.s32.totalorder %v162, 2
    %vm183 = vcmp.lt.s32.totalorder %v162, 3
    %vm184 = vcmp.lt.s32.totalorder %v162, 4
    %v185 = vsel %vm181, %v165, %v168
    %v186 = vsel %vm184, %v174, 2102212464
    %v187 = vsel %vm183, %v171, %v186
    %v188 = vsel %vm182, %v185, %v187
    %v189 = vsel %vm181, %v168, %v171
    %v190 = vsel %vm184, %v177, 920167782
    %v191 = vsel %vm183, %v174, %v190
    %v192 = vsel %vm182, %v189, %v191
    %v193 = vsel %vm181, %v171, %v174
    %v194 = vsel %vm184, %v180, 1326507024
    %v195 = vsel %vm183, %v177, %v194
    %v196 = vsel %vm182, %v193, %v195
    %v197 = vshll.u32 %v157, 8
    %v198 = vmul.u32.u64.compose %v197, %v196
    %v199 = vextract.low.u32 %v198
    %v200 = vextract.high.u32 %v198
    %v201 = vmul.u32.u64.compose %v197, %v192
    %v202 = vextract.low.u32 %v201
    %v203 = vextract.high.u32 %v201
    %v204 = vmul.u32 %v197, %v188
    %v205 = vadd.s32 %v200, %v202
    %vm206 = vc.u32 %v200, %v202
    %v207 = vadd.s32 %v203, 1
    %v208 = vsel %vm206, %v207, %v203
    %v209 = vadd.s32 %v204, %v208
    %v210 = vadd.s32 %v209, 536870912
    %v211 = vshrl.u32 %v210, 30
    %v212 = vshll.u32 %v211, 30
    %v213 = vsub.s32 %v209, %v212
    %vm214 = vcmp.lt.s32.totalorder %v213, 0
    %v215 = vsub.s32 0, %v213
    %v216 = vsel %vm214, %v215, %v213
    %v217 = vclz %v216
    %v218 = vsub.s32 %v217, 2
    %vm219 = vcmp.gt.s32.totalorder 0, %v218
    %v220 = vsel %vm219, 0, %v218
    %v221 = vsub.s32 32, %v220
    %v222 = vshll.u32 %v213, %v220
    %v223 = vshrl.u32 %v205, %v221
    %v224 = vor.u32 %v222, %v223
    %v225 = vsub.s32 4294967266, %v220
    %v226 = vadd.s32 %v225, 127
    %v227 = vshll.u32 %v226, 23
    %v228 = vor.u32 4788187, %v227
    %v229 = vand.u32 2147483647, %v228
    %v231 = vcvt.s32.f32 %v224
    %v232 = vmul.f32 %v231, %v229
    %v233 = vxor.u32 %v232, 2147483648
    %v234 = vsel %vm151, %v233, %v232
    %v235 = vsub.s32 4, %v211
    %v236 = vsel %vm151, %v235, %v211
    %v237 = vsel %vm150, %v137, %v234
    %v238 = vsel %vm150, 0, %v236
    %v239 = vcosq.f32.pop %v237
    %v240 = vsinq.f32.pop %v237
    %vm241 = vweird.f32 %v137
    %v242 = vand.u32 %v238, 3
    %vm243 = vcmp.lt.s32.totalorder %v242, 2
    %vm244 = vcmp.eq.s32.totalorder %v242, 0
    %v245 = vxor.u32 %v240, 2147483648
    %v246 = vsel %vm244, %v239, %v245
    %vm247 = vcmp.eq.s32.totalorder %v242, 2
    %v248 = vxor.u32 %v239, 2147483648
    %v249 = vsel %vm247, %v248, %v240
    %v250 = vsel %vm243, %v246, %v249
    %v251 = vsel %vm241, nan, %v250
    %v252 = vmul.f32 %v147, %v251
    %v253 = vstv %s43
    %v254 = vmul.f32 %v252, %v253
    %v255 = vadd.f32 %v148, %v254
    %256 = vst [vmem:[#allocation8] sm:$0xff] %v255
    %v257 = vld [vmem:[#allocation7 + $0x8] sm:$0xff]
    %v258 = vand.u32 2147483647, %v137
    %vm259 = vcmp.le.f32.partialorder %v258, 0.7853982
    %vm260 = vcmp.lt.s32.totalorder %v137, 0
    %v261 = vand.u32 %v137, 2139095040
    %v262 = vshrl.u32 %v261, 23
    %v263 = vsub.s32 %v262, 127
    %v264 = vand.u32 2147483647, %v137
    %v265 = vand.u32 %v264, 8388607
    %v266 = vor.u32 %v265, 8388608
    %v267 = vsub.s32 0, %v266
    %v268 = vadd.s32 %v263, 1
    %vm269 = vcmp.gt.s32.totalorder %v268, 0
    %v270 = vsel %vm269, %v268, 0
    %v271 = vshrl.u32 %v270, 5
    %v272 = vand.u32 %v270, 31
    %v273 = vsub.s32 32, %v272
    %v274 = vshrl.u32 683565275, %v273
    %v275 = vshll.u32 683565275, %v272
    %v276 = vshrl.u32 2475754826, %v273
    %v277 = vor.u32 %v275, %v276
    %v278 = vshll.u32 2475754826, %v272
    %v279 = vshrl.u32 2131351028, %v273
    %v280 = vor.u32 %v278, %v279
    %v281 = vshll.u32 2131351028, %v272
    %v282 = vshrl.u32 2102212464, %v273
    %v283 = vor.u32 %v281, %v282
    %v284 = vshll.u32 2102212464, %v272
    %v285 = vshrl.u32 920167782, %v273
    %v286 = vor.u32 %v284, %v285
    %v287 = vshll.u32 920167782, %v272
    %v288 = vshrl.u32 1326507024, %v273
    %v289 = vor.u32 %v287, %v288
    %vm290 = vcmp.lt.s32.totalorder %v271, 1
    %vm291 = vcmp.lt.s32.totalorder %v271, 2
    %vm292 = vcmp.lt.s32.totalorder %v271, 3
    %vm293 = vcmp.lt.s32.totalorder %v271, 4
    %v294 = vsel %vm290, %v274, %v277
    %v295 = vsel %vm293, %v283, 2102212464
    %v296 = vsel %vm292, %v280, %v295
    %v297 = vsel %vm291, %v294, %v296
    %v298 = vsel %vm290, %v277, %v280
    %v299 = vsel %vm293, %v286, 920167782
    %v300 = vsel %vm292, %v283, %v299
    %v301 = vsel %vm291, %v298, %v300
    %v302 = vsel %vm290, %v280, %v283
    %v303 = vsel %vm293, %v289, 1326507024
    %v304 = vsel %vm292, %v286, %v303
    %v305 = vsel %vm291, %v302, %v304
    %v306 = vshll.u32 %v266, 8
    %v307 = vmul.u32.u64.compose %v306, %v305
    %v308 = vextract.low.u32 %v307
    %v309 = vextract.high.u32 %v307
    %v310 = vmul.u32.u64.compose %v306, %v301
    %v311 = vextract.low.u32 %v310
    %v312 = vextract.high.u32 %v310
    %v313 = vmul.u32 %v306, %v297
    %v314 = vadd.s32 %v309, %v311
    %vm315 = vc.u32 %v309, %v311
    %v316 = vadd.s32 %v312, 1
    %v317 = vsel %vm315, %v316, %v312
    %v318 = vadd.s32 %v313, %v317
    %v319 = vadd.s32 %v318, 536870912
    %v320 = vshrl.u32 %v319, 30
    %v321 = vshll.u32 %v320, 30
    %v322 = vsub.s32 %v318, %v321
    %vm323 = vcmp.lt.s32.totalorder %v322, 0
    %v324 = vsub.s32 0, %v322
    %v325 = vsel %vm323, %v324, %v322
    %v326 = vclz %v325
    %v327 = vsub.s32 %v326, 2
    %vm328 = vcmp.gt.s32.totalorder 0, %v327
    %v329 = vsel %vm328, 0, %v327
    %v330 = vsub.s32 32, %v329
    %v331 = vshll.u32 %v322, %v329
    %v332 = vshrl.u32 %v314, %v330
    %v333 = vor.u32 %v331, %v332
    %v334 = vsub.s32 4294967266, %v329
    %v335 = vadd.s32 %v334, 127
    %v336 = vshll.u32 %v335, 23
    %v337 = vor.u32 4788187, %v336
    %v338 = vand.u32 2147483647, %v337
    %v340 = vcvt.s32.f32 %v333
    %v341 = vmul.f32 %v340, %v338
    %v342 = vxor.u32 %v341, 2147483648
    %v343 = vsel %vm260, %v342, %v341
    %v344 = vsub.s32 4, %v320
    %v345 = vsel %vm260, %v344, %v320
    %v346 = vsel %vm259, %v137, %v343
    %v347 = vsel %vm259, 0, %v345
    %v348 = vcosq.f32.pop %v346
    %v349 = vsinq.f32.pop %v346
    %vm350 = vweird.f32 %v137
    %v351 = vadd.s32 %v347, 3
    %v352 = vand.u32 %v351, 3
    %vm353 = vcmp.lt.s32.totalorder %v352, 2
    %vm354 = vcmp.eq.s32.totalorder %v352, 0
    %v355 = vxor.u32 %v349, 2147483648
    %v356 = vsel %vm354, %v348, %v355
    %vm357 = vcmp.eq.s32.totalorder %v352, 2
    %v358 = vxor.u32 %v348, 2147483648
    %v359 = vsel %vm357, %v358, %v349
    %v360 = vsel %vm353, %v356, %v359
    %v361 = vsel %vm350, nan, %v360
    %v362 = vmul.f32 %v147, %v361
    %v363 = vmul.f32 %v362, %v253
    %v364 = vadd.f32 %v257, %v363
    %365 = vst [vmem:[#allocation8 + $0x8] sm:$0xff] %v364
    // Predicated region
    $region22: #{tpu_custom_call.1} parent=1 // pred_check
      _
    $region23: #{tpu_custom_call.1} parent=1 // pred_check_branch
      %367 = sbr.rel (0) target = $region25
    $region24: #{tpu_custom_call.1} parent=1 // pred_region
      %s369 = ssub.s32 256, 256
      %370 = vsyncadd [#allocation5], %s369
      %s371 = sshll.u32 [#allocation8], 4
      %s372 = int_to_ptr.vmem [resolvable:$true] %s371
      %377 = dma.vmem_to_hbm [thread:$0]  %s372, 256, %s3, [#allocation5], 128, 128, 8
    $region25: #{tpu_custom_call.1} parent=1 // pred_fallthru
      _
    // Predicated region
    $region26: #{tpu_custom_call.1} parent=1 // pred_check
      _
    $region27: #{tpu_custom_call.1} parent=1 // pred_check_branch
      %379 = sbr.rel (0) target = $region29
    $region28: #{tpu_custom_call.1} parent=1 // pred_region
      %380 = dma.done [#allocation5], 256
    $region29: #{tpu_custom_call.1} parent=1 // pred_fallthru
      _
    %381 = vsyncpa [#allocation4], 1
    %382 = vsyncpa [#allocation5], 1
    %383 = vsyncpa [#allocation6], 1

</llo_original>
